<compile_context>
chip_gen: v6e
topology: v6e:2x2x1
jax: 0.10.0
libtpu: 0.0.40
codegen_flags: <defaults>
</compile_context>

<pallas_src>
import functools
import math

import jax
import jax.numpy as jnp
from jax.experimental import pallas as pl
from jax.experimental.pallas import tpu as pltpu

_TARGET_BLOCK_BYTES = 2 << 20  # ~2 MiB/block: 2x(in+out) double buffers = 8 MiB << 16 MiB (v5e)


def _spiking_kernel(x_ref, o_ref, *, threshold):
    x = x_ref[...]
    o_ref[...] = (x >= jnp.asarray(threshold, x.dtype)).astype(o_ref.dtype)


def _primitive_kernel(x_ref, o_ref, *, alpha, threshold):
    # Compute in f32 inside the kernel (v5e has no bf16 VPU/EUP); I/O stays native dtype.
    x = x_ref[...].astype(jnp.float32)
    y = jax.nn.sigmoid(alpha * (x - threshold))
    o_ref[...] = y.astype(o_ref.dtype)


def _pick_cols(n_elem):
    """Widest lane-multiple column count that divides n_elem (avoids wrapper pad)."""
    for c in (4096, 2048, 1024, 512, 256, 128):
        if n_elem % c == 0:
            return c, False
    return 128, True  # needs padding


def _run_elementwise(kernel, x_2d, *, transcendental):
    rows, cols = x_2d.shape
    itemsize = jnp.dtype(x_2d.dtype).itemsize

    # Row-tile sized to ~2 MiB per block, multiple of 8 sublanes, clamped to rows
    # (a full-extent block is always legal regardless of the (8,128) rule).
    tile_r = max(8, (_TARGET_BLOCK_BYTES // (cols * itemsize)) // 8 * 8)
    tile_r = min(tile_r, rows)

    grid = (pl.cdiv(rows, tile_r),)
    n = rows * cols
    cost = pl.CostEstimate(
        flops=5 * n,
        transcendentals=(n if transcendental else 0),
        bytes_accessed=2 * n * itemsize,
    )

    return pl.pallas_call(
        kernel,
        out_shape=jax.ShapeDtypeStruct((rows, cols), x_2d.dtype),
        grid=grid,
        in_specs=[pl.BlockSpec((tile_r, cols), lambda i: (i, 0))],
        out_specs=pl.BlockSpec((tile_r, cols), lambda i: (i, 0)),
        compiler_params=pltpu.CompilerParams(
            dimension_semantics=("parallel",),
        ),
        cost_estimate=cost,
    )(x_2d)


@functools.partial(jax.jit, static_argnames=("spiking", "alpha", "threshold"))
def _surrogate_forward(x, *, spiking, alpha, threshold):
    orig_shape = x.shape
    n_elem = math.prod(orig_shape) if orig_shape else 1

    flat = x.reshape(-1)
    cols, needs_pad = _pick_cols(n_elem)
    if needs_pad:
        padded = ((n_elem + cols - 1) // cols) * cols
        flat = jnp.pad(flat, (0, padded - n_elem))
    else:
        padded = n_elem
    x_2d = flat.reshape(padded // cols, cols)

    if spiking:
        kernel = functools.partial(_spiking_kernel, threshold=threshold)
        transcendental = False
    else:
        kernel = functools.partial(_primitive_kernel, alpha=alpha, threshold=threshold)
        transcendental = True

    out_2d = _run_elementwise(kernel, x_2d, transcendental=transcendental)
    out = out_2d.reshape(-1)
    if padded != n_elem:
        out = out[:n_elem]
    return out.reshape(orig_shape)


class SurrogateFunctionBase:
    """JAX/Pallas port of the PyTorch SurrogateFunctionBase module (forward only)."""

    def __init__(self, alpha, spiking=True, n=1, threshold=1.0):
        self.spiking = spiking
        self.alpha = float(alpha)
        self.n = n  # accepted for parity with the PyTorch base class; unused here
        self.threshold = float(threshold)

    def set_spiking_mode(self, spiking: bool):
        self.spiking = spiking

    def extra_repr(self):
        return f"alpha={self.alpha}, spiking={self.spiking}"

    def __call__(self, x):
        return _surrogate_forward(
            x, spiking=self.spiking, alpha=self.alpha, threshold=self.threshold
        )


if __name__ == "__main__":
    key = jax.random.PRNGKey(0)
    # Small NCHW input consistent with typical usage of surrogate functions.
    x = jax.random.normal(key, (2, 4, 16, 16), dtype=jnp.float32)

    # Spiking mode: heaviside(x - threshold)
    mod = SurrogateFunctionBase(alpha=2.0, spiking=True, n=1, threshold=1.0)
    y_spike = jax.block_until_ready(mod(x))
    ref_spike = (x >= 1.0).astype(jnp.float32)
    assert y_spike.shape == x.shape and y_spike.dtype == x.dtype
    assert jnp.allclose(y_spike, ref_spike)

    # Non-spiking (primitive) mode: sigmoid(alpha * (x - threshold))
    mod.set_spiking_mode(False)
    y_prim = jax.block_until_ready(mod(x))
    ref_prim = jax.nn.sigmoid(2.0 * (x - 1.0))
    assert y_prim.shape == x.shape and y_prim.dtype == x.dtype
    assert jnp.allclose(y_prim, ref_prim, atol=1e-6)

    # Native-dtype path: bf16 stays bf16 end-to-end (no wrapper upcast).
    x_bf16 = x.astype(jnp.bfloat16)
    mod.set_spiking_mode(True)
    y_spike_bf16 = jax.block_until_ready(mod(x_bf16))
    ref_spike_bf16 = (x_bf16 >= jnp.bfloat16(1.0)).astype(jnp.bfloat16)
    assert y_spike_bf16.dtype == jnp.bfloat16
    assert jnp.array_equal(y_spike_bf16, ref_spike_bf16)

    mod.set_spiking_mode(False)
    y_prim_bf16 = jax.block_until_ready(mod(x_bf16))
    ref_prim_bf16 = jax.nn.sigmoid(2.0 * (x_bf16.astype(jnp.float32) - 1.0))
    assert y_prim_bf16.dtype == jnp.bfloat16
    assert jnp.allclose(y_prim_bf16.astype(jnp.float32), ref_prim_bf16, atol=2e-2)

    # Ragged shape exercising the pad + tail-slice path.
    x_rag = jax.random.normal(jax.random.PRNGKey(1), (3, 5, 7), dtype=jnp.float32)
    mod.set_spiking_mode(True)
    y_rag = jax.block_until_ready(mod(x_rag))
    assert jnp.allclose(y_rag, (x_rag >= 1.0).astype(jnp.float32))

    print("KERNEL_OK")
</pallas_src>

<mosaic_0001>
module attributes {stable_mosaic.version = 11 : i64} {
  func.func @_spiking_kernel(%arg0: i32, %arg1: memref<1x2048xf32, #tpu.memory_space<vmem>>, %arg2: memref<1x2048xf32, #tpu.memory_space<vmem>>) attributes {dimension_semantics = [#tpu.dimension_semantics<parallel>], iteration_bounds = array<i64: 1>, scalar_prefetch = 0 : i64, scratch_operands = 0 : i64, tpu.core_type = #tpu.core_type<tc>, window_params = [{transform_indices = @transform_0, window_bounds = array<i64: 1, 2048>}, {transform_indices = @transform_1, window_bounds = array<i64: 1, 2048>}]} {
    %c0 = arith.constant 0 : index
    %c0_0 = arith.constant 0 : index
    %0 = vector.load %arg1[%c0, %c0_0] : memref<1x2048xf32, #tpu.memory_space<vmem>>, vector<1x2048xf32>
    %cst = arith.constant 1.000000e+00 : f32
    %1 = vector.broadcast %cst : f32 to vector<1x2048xf32>
    %2 = arith.cmpf oge, %0, %1 : vector<1x2048xf32>
    %3 = arith.extui %2 : vector<1x2048xi1> to vector<1x2048xi32>
    %4 = arith.sitofp %3 : vector<1x2048xi32> to vector<1x2048xf32>
    %c0_1 = arith.constant 0 : index
    %c0_2 = arith.constant 0 : index
    %5 = vector.load %arg2[%c0_1, %c0_2] : memref<1x2048xf32, #tpu.memory_space<vmem>>, vector<1x2048xf32>
    tpu.vector_store %arg2[%c0_1, %c0_2], %4 {strides = array<i32>} : memref<1x2048xf32, #tpu.memory_space<vmem>>, vector<1x2048xf32>,
    return
  }
  func.func @transform_0(%arg0: i32) -> (i32, i32) {
    %c0_i32 = arith.constant 0 : i32
    %c0_i32_0 = arith.constant 0 : i32
    return %arg0, %c0_i32 : i32, i32
  }
  func.func @transform_1(%arg0: i32) -> (i32, i32) {
    %c0_i32 = arith.constant 0 : i32
    %c0_i32_0 = arith.constant 0 : i32
    return %arg0, %c0_i32 : i32, i32
  }
}

</mosaic_0001>

<llo_original>
// kernel: _surrogate_forward.1
$region0: #{_surrogate_forward.1}
  #allocation0 [shape = 'u32[]', space=smem, size = 0x4, offset = 0x4, fixed_abs, tag = 'smem constant byte address 0x4 - core index']
  #allocation1 [shape = 'u32[144,128]{1,0:T(1,128)}', space=vmem, size = 0x12000, scoped, tag = 'internal scratch']
  %s0 = inlined_call_operand.vmem [shape: f32[1,2048], index: 0, kind: input, shape index: {}]
  %s1 = inlined_call_operand.vmem [shape: f32[1,2048], index: 1, kind: output, shape index: {}]
  %s2 = sld [smem:[#allocation0]]
  $region14: #{_surrogate_forward.1} parent=0
    _
  %s4 = ssub.s32 1, %s2
  %s5 = scalar_select 0, %s4, %s2
  // Predicated region
  $region2: #{_surrogate_forward.1} parent=0 // pred_check
    _
  $region3: #{_surrogate_forward.1} parent=0 // pred_check_branch
    %7 = sbr.rel (0) target = $region5
  $region4: #{_surrogate_forward.1} parent=0 // pred_region
    _
  $region5: #{_surrogate_forward.1} parent=0 // pred_fallthru
    _
  %v8 = vld [vmem:[%s0] sm:$0xff]
  %v9 = vld [vmem:[%s0 + $0x8] sm:$0xff]
  %vm10 = vcmp.ge.f32.partialorder %v8, 1.0
  %vm11 = vcmp.ge.f32.partialorder %v9, 1.0
  %v12 = vsel %vm10, 1, 0
  %v13 = vsel %vm11, 1, 0
  %v14 = vcvt.s32.f32 %v12
  %v15 = vcvt.s32.f32 %v13
  %16 = vst [vmem:[%s1] sm:$0xff] %v14
  %17 = vst [vmem:[%s1 + $0x8] sm:$0xff] %v15
  // Predicated region
  $region6: #{_surrogate_forward.1} parent=0 // pred_check
    _
  $region7: #{_surrogate_forward.1} parent=0 // pred_check_branch
    %19 = sbr.rel (0) target = $region9
  $region8: #{_surrogate_forward.1} parent=0 // pred_region
    _
  $region9: #{_surrogate_forward.1} parent=0 // pred_fallthru
    _
  // Predicated region
  $region10: #{_surrogate_forward.1} parent=0 // pred_check
    _
  $region11: #{_surrogate_forward.1} parent=0 // pred_check_branch
    %21 = sbr.rel (0) target = $region13
  $region12: #{_surrogate_forward.1} parent=0 // pred_region
    _
  $region13: #{_surrogate_forward.1} parent=0 // pred_fallthru
    _

</llo_original>
